<compile_context>
chip_gen: v5e
topology: v5e:2x2
jax: 0.10.0
libtpu: 0.0.40
codegen_flags: <defaults>
</compile_context>

<pallas_src>
import functools

import jax
import jax.numpy as jnp
from jax.experimental import pallas as pl
from jax.experimental.pallas import tpu as pltpu

_SUBLANE = 8  # f32 sublane granularity (second-to-last dim)


def _round_up(n: int, m: int) -> int:
    return ((n + m - 1) // m) * m


def _fused_mlp_kernel(x_ref, *refs, n_layers: int):
    """Run the whole MLP chain on one VMEM-resident batch tile.

    refs = (w0, b0, w1, b1, ..., w_{L-1}, b_{L-1}, o_ref)
    Each layer: h = h @ W + b ; tanh on all but the last layer.
    Matmuls run on the MXU in bf16 with f32 accumulation; bias add / tanh in f32.
    """
    o_ref = refs[-1]
    params = refs[:-1]
    h = x_ref[...]                               # f32 (tb, d_in)
    for i in range(n_layers):
        w = params[2 * i][...]                   # bf16 (d_in, d_out)
        b = params[2 * i + 1][...]               # f32  (1, d_out), broadcasts over rows
        h = jnp.dot(h.astype(jnp.bfloat16), w,
                    preferred_element_type=jnp.float32) + b
        if i < n_layers - 1:
            h = jnp.tanh(h)
    o_ref[...] = h.astype(o_ref.dtype)


def init_dense_nn_params(key, input_size, hidden_sizes, output_size):
    """nn.Linear-style U(-1/sqrt(fan_in), 1/sqrt(fan_in)) init (f32, unpadded).

    Weights are stored transposed vs. PyTorch, i.e. (D_in, D_out).
    """
    sizes = [input_size] + list(hidden_sizes) + [output_size]
    params = []
    for i in range(len(sizes) - 1):
        fan_in, fan_out = sizes[i], sizes[i + 1]
        key, kw, kb = jax.random.split(key, 3)
        bound = 1.0 / float(fan_in) ** 0.5
        w = jax.random.uniform(kw, (fan_in, fan_out), jnp.float32, -bound, bound)
        b = jax.random.uniform(kb, (1, fan_out), jnp.float32, -bound, bound)
        params.append((w, b))
    return params


def prepare_params(params):
    """One-time (outside the per-call path): cast weights to bf16 for the MXU.

    Biases stay f32 (bias add + tanh run on the VPU/EUP in f32). No padding.
    """
    return [(w.astype(jnp.bfloat16), b.astype(jnp.float32)) for (w, b) in params]


def _pick_batch_tile(batch: int) -> int:
    """Batch tile: as big as useful (<=512 rows), >=2 tiles for large batches
    so the 'parallel' grid axis actually shards across v7x's two TensorCores."""
    tb = _round_up(batch, _SUBLANE)
    if tb > 256:
        n_tiles = max(2, pl.cdiv(batch, 512))
        tb = _round_up(pl.cdiv(batch, n_tiles), _SUBLANE)
    return tb


def dense_nn_forward(x, prepared_params):
    """Matches DenseNN.forward: tanh after every hidden Linear, none on output.

    `prepared_params` must come from prepare_params() (bf16 weights, f32 biases).
    """
    n_layers = len(prepared_params)
    B, d_in = x.shape
    d_out = prepared_params[-1][0].shape[1]

    tb = _pick_batch_tile(B)
    b_pad = _round_up(B, tb)
    if b_pad != B:
        # Only batch (sublane) padding of x; no lane padding of anything.
        x = jnp.pad(x, ((0, b_pad - B), (0, 0)))

    flat_params = []
    # x block: last dim is the full array extent -> exempt from the 128 rule.
    in_specs = [pl.BlockSpec((tb, d_in), lambda i: (i, 0))]
    for w, b in prepared_params:
        flat_params += [w, b]
        # Full-extent blocks + constant index maps: parameters are DMA'd once
        # and stay resident in VMEM. Buffered(1): no pointless double buffer.
        in_specs.append(pl.BlockSpec(w.shape, lambda i: (0, 0),
                                     pipeline_mode=pl.Buffered(1)))
        in_specs.append(pl.BlockSpec(b.shape, lambda i: (0, 0),
                                     pipeline_mode=pl.Buffered(1)))

    out = pl.pallas_call(
        functools.partial(_fused_mlp_kernel, n_layers=n_layers),
        out_shape=jax.ShapeDtypeStruct((b_pad, d_out), jnp.float32),
        grid=(b_pad // tb,),
        in_specs=in_specs,
        out_specs=pl.BlockSpec((tb, d_out), lambda i: (i, 0)),
        compiler_params=pltpu.CompilerParams(
            dimension_semantics=("parallel",),
            # For large hidden sizes, set vmem_limit_bytes explicitly here and
            # re-check the tb / weight-residency budget against v7x's 64 MiB.
        ),
    )(x, *flat_params)

    return out[:B] if b_pad != B else out


if __name__ == "__main__":
    # Small shapes consistent with the module's forward.
    input_size = 4
    hidden_sizes = [32, 32, 32]
    output_size = 2
    batch = 2

    key = jax.random.PRNGKey(0)
    key, kx = jax.random.split(key)
    x = jax.random.normal(kx, (batch, input_size), jnp.float32)

    params = init_dense_nn_params(key, input_size, hidden_sizes, output_size)
    prepared = prepare_params(params)   # one-time, outside the per-call path

    fwd = jax.jit(dense_nn_forward)
    out = jax.block_until_ready(fwd(x, prepared))

    # Reference with the same bf16-matmul / f32-accumulate math (plain JAX).
    ref = x
    for i, (w, b) in enumerate(params):
        ref = jnp.dot(ref.astype(jnp.bfloat16), w.astype(jnp.bfloat16),
                      preferred_element_type=jnp.float32) + b
        if i < len(params) - 1:
            ref = jnp.tanh(ref)

    # Full-precision reference (sanity check; bf16 MXU inputs -> looser tol).
    ref32 = x
    for i, (w, b) in enumerate(params):
        ref32 = ref32 @ w + b
        if i < len(params) - 1:
            ref32 = jnp.tanh(ref32)

    assert out.shape == (batch, output_size)
    assert jnp.allclose(out, ref, atol=1e-4, rtol=1e-4)
    assert jnp.allclose(out, ref32, atol=5e-2, rtol=5e-2)

    print("KERNEL_OK")
</pallas_src>

<mosaic_0001>
module attributes {stable_mosaic.version = 11 : i64} {
  func.func @_fused_mlp_kernel(%arg0: i32, %arg1: memref<8x4xf32, #tpu.memory_space<vmem>>, %arg2: memref<4x32xbf16, #tpu.memory_space<vmem>>, %arg3: memref<1x32xf32, #tpu.memory_space<vmem>>, %arg4: memref<32x32xbf16, #tpu.memory_space<vmem>>, %arg5: memref<1x32xf32, #tpu.memory_space<vmem>>, %arg6: memref<32x32xbf16, #tpu.memory_space<vmem>>, %arg7: memref<1x32xf32, #tpu.memory_space<vmem>>, %arg8: memref<32x2xbf16, #tpu.memory_space<vmem>>, %arg9: memref<1x2xf32, #tpu.memory_space<vmem>>, %arg10: memref<8x2xf32, #tpu.memory_space<vmem>>) attributes {dimension_semantics = [#tpu.dimension_semantics<parallel>], iteration_bounds = array<i64: 1>, scalar_prefetch = 0 : i64, scratch_operands = 0 : i64, tpu.core_type = #tpu.core_type<tc>, window_params = [{transform_indices = @transform_0, window_bounds = array<i64: 8, 4>}, {pipeline_mode = #tpu.pipeline_mode<synchronous>, transform_indices = @transform_1, window_bounds = array<i64: 4, 32>}, {pipeline_mode = #tpu.pipeline_mode<synchronous>, transform_indices = @transform_2, window_bounds = array<i64: 1, 32>}, {pipeline_mode = #tpu.pipeline_mode<synchronous>, transform_indices = @transform_3, window_bounds = array<i64: 32, 32>}, {pipeline_mode = #tpu.pipeline_mode<synchronous>, transform_indices = @transform_4, window_bounds = array<i64: 1, 32>}, {pipeline_mode = #tpu.pipeline_mode<synchronous>, transform_indices = @transform_5, window_bounds = array<i64: 32, 32>}, {pipeline_mode = #tpu.pipeline_mode<synchronous>, transform_indices = @transform_6, window_bounds = array<i64: 1, 32>}, {pipeline_mode = #tpu.pipeline_mode<synchronous>, transform_indices = @transform_7, window_bounds = array<i64: 32, 2>}, {pipeline_mode = #tpu.pipeline_mode<synchronous>, transform_indices = @transform_8, window_bounds = array<i64: 1, 2>}, {transform_indices = @transform_9, window_bounds = array<i64: 8, 2>}]} {
    %c0 = arith.constant 0 : index
    %c0_0 = arith.constant 0 : index
    %0 = vector.load %arg1[%c0, %c0_0] : memref<8x4xf32, #tpu.memory_space<vmem>>, vector<8x4xf32>
    %c0_1 = arith.constant 0 : index
    %c0_2 = arith.constant 0 : index
    %1 = vector.load %arg2[%c0_1, %c0_2] : memref<4x32xbf16, #tpu.memory_space<vmem>>, vector<4x32xbf16>
    %c0_3 = arith.constant 0 : index
    %c0_4 = arith.constant 0 : index
    %2 = vector.load %arg3[%c0_3, %c0_4] : memref<1x32xf32, #tpu.memory_space<vmem>>, vector<1x32xf32>
    %3 = arith.truncf %0 : vector<8x4xf32> to vector<8x4xbf16>
    %cst = arith.constant dense<0.000000e+00> : vector<8x32xf32>
    %4 = tpu.matmul %3, %1, %cst {dimension_numbers = #tpu.dot_dimension_numbers<[1], [0], [0], [1], [0, 0, 1, 1], [], []>} : vector<8x4xbf16>, vector<4x32xbf16>, vector<8x32xf32> -> vector<8x32xf32>
    %5 = vector.broadcast %2 : vector<1x32xf32> to vector<8x32xf32>
    %6 = arith.addf %4, %5 : vector<8x32xf32>
    %7 = math.tanh %6 : vector<8x32xf32>
    %c0_5 = arith.constant 0 : index
    %c0_6 = arith.constant 0 : index
    %8 = vector.load %arg4[%c0_5, %c0_6] : memref<32x32xbf16, #tpu.memory_space<vmem>>, vector<32x32xbf16>
    %c0_7 = arith.constant 0 : index
    %c0_8 = arith.constant 0 : index
    %9 = vector.load %arg5[%c0_7, %c0_8] : memref<1x32xf32, #tpu.memory_space<vmem>>, vector<1x32xf32>
    %10 = arith.truncf %7 : vector<8x32xf32> to vector<8x32xbf16>
    %cst_9 = arith.constant dense<0.000000e+00> : vector<8x32xf32>
    %11 = tpu.matmul %10, %8, %cst_9 {dimension_numbers = #tpu.dot_dimension_numbers<[1], [0], [0], [1], [0, 0, 1, 1], [], []>} : vector<8x32xbf16>, vector<32x32xbf16>, vector<8x32xf32> -> vector<8x32xf32>
    %12 = vector.broadcast %9 : vector<1x32xf32> to vector<8x32xf32>
    %13 = arith.addf %11, %12 : vector<8x32xf32>
    %14 = math.tanh %13 : vector<8x32xf32>
    %c0_10 = arith.constant 0 : index
    %c0_11 = arith.constant 0 : index
    %15 = vector.load %arg6[%c0_10, %c0_11] : memref<32x32xbf16, #tpu.memory_space<vmem>>, vector<32x32xbf16>
    %c0_12 = arith.constant 0 : index
    %c0_13 = arith.constant 0 : index
    %16 = vector.load %arg7[%c0_12, %c0_13] : memref<1x32xf32, #tpu.memory_space<vmem>>, vector<1x32xf32>
    %17 = arith.truncf %14 : vector<8x32xf32> to vector<8x32xbf16>
    %cst_14 = arith.constant dense<0.000000e+00> : vector<8x32xf32>
    %18 = tpu.matmul %17, %15, %cst_14 {dimension_numbers = #tpu.dot_dimension_numbers<[1], [0], [0], [1], [0, 0, 1, 1], [], []>} : vector<8x32xbf16>, vector<32x32xbf16>, vector<8x32xf32> -> vector<8x32xf32>
    %19 = vector.broadcast %16 : vector<1x32xf32> to vector<8x32xf32>
    %20 = arith.addf %18, %19 : vector<8x32xf32>
    %21 = math.tanh %20 : vector<8x32xf32>
    %c0_15 = arith.constant 0 : index
    %c0_16 = arith.constant 0 : index
    %22 = vector.load %arg8[%c0_15, %c0_16] : memref<32x2xbf16, #tpu.memory_space<vmem>>, vector<32x2xbf16>
    %c0_17 = arith.constant 0 : index
    %c0_18 = arith.constant 0 : index
    %23 = vector.load %arg9[%c0_17, %c0_18] : memref<1x2xf32, #tpu.memory_space<vmem>>, vector<1x2xf32>
    %24 = arith.truncf %21 : vector<8x32xf32> to vector<8x32xbf16>
    %cst_19 = arith.constant dense<0.000000e+00> : vector<8x2xf32>
    %25 = tpu.matmul %24, %22, %cst_19 {dimension_numbers = #tpu.dot_dimension_numbers<[1], [0], [0], [1], [0, 0, 1, 1], [], []>} : vector<8x32xbf16>, vector<32x2xbf16>, vector<8x2xf32> -> vector<8x2xf32>
    %26 = vector.broadcast %23 : vector<1x2xf32> to vector<8x2xf32>
    %27 = arith.addf %25, %26 : vector<8x2xf32>
    %c0_20 = arith.constant 0 : index
    %c0_21 = arith.constant 0 : index
    %28 = vector.load %arg10[%c0_20, %c0_21] : memref<8x2xf32, #tpu.memory_space<vmem>>, vector<8x2xf32>
    tpu.vector_store %arg10[%c0_20, %c0_21], %27 {strides = array<i32>} : memref<8x2xf32, #tpu.memory_space<vmem>>, vector<8x2xf32>,
    return
  }
  func.func @transform_0(%arg0: i32) -> (i32, i32) {
    %c0_i32 = arith.constant 0 : i32
    %c0_i32_0 = arith.constant 0 : i32
    return %arg0, %c0_i32 : i32, i32
  }
  func.func @transform_1(%arg0: i32) -> (i32, i32) {
    %c0_i32 = arith.constant 0 : i32
    %c0_i32_0 = arith.constant 0 : i32
    %c0_i32_1 = arith.constant 0 : i32
    return %c0_i32, %c0_i32_0 : i32, i32
  }
  func.func @transform_2(%arg0: i32) -> (i32, i32) {
    %c0_i32 = arith.constant 0 : i32
    %c0_i32_0 = arith.constant 0 : i32
    %c0_i32_1 = arith.constant 0 : i32
    return %c0_i32, %c0_i32_0 : i32, i32
  }
  func.func @transform_3(%arg0: i32) -> (i32, i32) {
    %c0_i32 = arith.constant 0 : i32
    %c0_i32_0 = arith.constant 0 : i32
    %c0_i32_1 = arith.constant 0 : i32
    return %c0_i32, %c0_i32_0 : i32, i32
  }
  func.func @transform_4(%arg0: i32) -> (i32, i32) {
    %c0_i32 = arith.constant 0 : i32
    %c0_i32_0 = arith.constant 0 : i32
    %c0_i32_1 = arith.constant 0 : i32
    return %c0_i32, %c0_i32_0 : i32, i32
  }
  func.func @transform_5(%arg0: i32) -> (i32, i32) {
    %c0_i32 = arith.constant 0 : i32
    %c0_i32_0 = arith.constant 0 : i32
    %c0_i32_1 = arith.constant 0 : i32
    return %c0_i32, %c0_i32_0 : i32, i32
  }
  func.func @transform_6(%arg0: i32) -> (i32, i32) {
    %c0_i32 = arith.constant 0 : i32
    %c0_i32_0 = arith.constant 0 : i32
    %c0_i32_1 = arith.constant 0 : i32
    return %c0_i32, %c0_i32_0 : i32, i32
  }
  func.func @transform_7(%arg0: i32) -> (i32, i32) {
    %c0_i32 = arith.constant 0 : i32
    %c0_i32_0 = arith.constant 0 : i32
    %c0_i32_1 = arith.constant 0 : i32
    return %c0_i32, %c0_i32_0 : i32, i32
  }
  func.func @transform_8(%arg0: i32) -> (i32, i32) {
    %c0_i32 = arith.constant 0 : i32
    %c0_i32_0 = arith.constant 0 : i32
    %c0_i32_1 = arith.constant 0 : i32
    return %c0_i32, %c0_i32_0 : i32, i32
  }
  func.func @transform_9(%arg0: i32) -> (i32, i32) {
    %c0_i32 = arith.constant 0 : i32
    %c0_i32_0 = arith.constant 0 : i32
    return %arg0, %c0_i32 : i32, i32
  }
}

</mosaic_0001>

<llo_original>
// kernel: dense_nn_forward.1
$region0: #{dense_nn_forward.1}
  #allocation0 [shape = 'u32[]', space=smem, size = 0x4, offset = 0x4, fixed_abs, tag = 'smem constant byte address 0x4 - core index']
  #allocation1 [shape = 'u32[72,128]{1,0:T(1,128)}', space=vmem, size = 0x9000, scoped, tag = 'internal scratch']
  %s0 = inlined_call_operand.vmem [shape: f32[8,4], index: 0, kind: input, shape index: {}]
  %s1 = inlined_call_operand.vmem [shape: bf16[4,32], index: 1, kind: input, shape index: {}]
  %s2 = inlined_call_operand.vmem [shape: f32[1,32], index: 2, kind: input, shape index: {}]
  %s3 = inlined_call_operand.vmem [shape: bf16[32,32], index: 3, kind: input, shape index: {}]
  %s4 = inlined_call_operand.vmem [shape: f32[1,32], index: 4, kind: input, shape index: {}]
  %s5 = inlined_call_operand.hbm [shape: bf16[32,32], index: 5, kind: input, shape index: {}]
  %s6 = inlined_call_operand.vmem [shape: f32[1,32], index: 6, kind: input, shape index: {}]
  %s7 = inlined_call_operand.vmem [shape: bf16[32,2], index: 7, kind: input, shape index: {}]
  %s8 = inlined_call_operand.vmem [shape: f32[1,2], index: 8, kind: input, shape index: {}]
  %s9 = inlined_call_operand.vmem [shape: f32[8,2], index: 9, kind: output, shape index: {}]
  %s10 = sld [smem:[#allocation0]]
  $region50: #{dense_nn_forward.1} parent=0
    _
  %s12 = ssub.s32 1, %s10
  %s13 = scalar_select 0, %s12, %s10
  $region1: #{dense_nn_forward.1} parent=0
    #allocation2 [shape = 'u8[8192]{0}', space=vmem, size = 0x2000, scoped, tag = 'input window, operand 5, single buffered']
    #allocation3 [shape = 's32[1]{0}', space=sflag, size = 0x4, scoped, tag = 'scoped memory for dense_nn_forward.1']
    %14 = vsyncpa [#allocation3], 0
    // Predicated region
    $region2: #{dense_nn_forward.1} parent=1 // pred_check
      _
    $region3: #{dense_nn_forward.1} parent=1 // pred_check_branch
      %16 = sbr.rel (0) target = $region5
    $region4: #{dense_nn_forward.1} parent=1 // pred_region
      _
    $region5: #{dense_nn_forward.1} parent=1 // pred_fallthru
      _
    // Predicated region
    $region6: #{dense_nn_forward.1} parent=1 // pred_check
      _
    $region7: #{dense_nn_forward.1} parent=1 // pred_check_branch
      %18 = sbr.rel (0) target = $region9
    $region8: #{dense_nn_forward.1} parent=1 // pred_region
      _
    $region9: #{dense_nn_forward.1} parent=1 // pred_fallthru
      _
    // Predicated region
    $region10: #{dense_nn_forward.1} parent=1 // pred_check
      _
    $region11: #{dense_nn_forward.1} parent=1 // pred_check_branch
      %20 = sbr.rel (0) target = $region13
    $region12: #{dense_nn_forward.1} parent=1 // pred_region
      _
    $region13: #{dense_nn_forward.1} parent=1 // pred_fallthru
      _
    // Predicated region
    $region14: #{dense_nn_forward.1} parent=1 // pred_check
      _
    $region15: #{dense_nn_forward.1} parent=1 // pred_check_branch
      %22 = sbr.rel (0) target = $region17
    $region16: #{dense_nn_forward.1} parent=1 // pred_region
      _
    $region17: #{dense_nn_forward.1} parent=1 // pred_fallthru
      _
    // Predicated region
    $region18: #{dense_nn_forward.1} parent=1 // pred_check
      _
    $region19: #{dense_nn_forward.1} parent=1 // pred_check_branch
      %24 = sbr.rel (0) target = $region21
    $region20: #{dense_nn_forward.1} parent=1 // pred_region
      _
    $region21: #{dense_nn_forward.1} parent=1 // pred_fallthru
      _
    // Predicated region
    $region22: #{dense_nn_forward.1} parent=1 // pred_check
      _
    $region23: #{dense_nn_forward.1} parent=1 // pred_check_branch
      %26 = sbr.rel (0) target = $region25
    $region24: #{dense_nn_forward.1} parent=1 // pred_region
      %28 = vsyncadd [#allocation3], 0
      %s29 = sshll.u32 %s5, 4
      %s30 = int_to_ptr.hbm [resolvable:$true] %s29
      %s31 = sshll.u32 [#allocation2], 4
      %s32 = int_to_ptr.vmem [resolvable:$true] %s31
      %37 = dma.hbm_to_vmem [thread:$0]  %s30, 256, %s32, [#allocation3], 64, 64, 4
    $region25: #{dense_nn_forward.1} parent=1 // pred_fallthru
      _
    // Predicated region
    $region26: #{dense_nn_forward.1} parent=1 // pred_check
      _
    $region27: #{dense_nn_forward.1} parent=1 // pred_check_branch
      %39 = sbr.rel (0) target = $region29
    $region28: #{dense_nn_forward.1} parent=1 // pred_region
      _
    $region29: #{dense_nn_forward.1} parent=1 // pred_fallthru
      _
    // Predicated region
    $region30: #{dense_nn_forward.1} parent=1 // pred_check
      _
    $region31: #{dense_nn_forward.1} parent=1 // pred_check_branch
      %41 = sbr.rel (0) target = $region33
    $region32: #{dense_nn_forward.1} parent=1 // pred_region
      _
    $region33: #{dense_nn_forward.1} parent=1 // pred_fallthru
      _
    // Predicated region
    $region34: #{dense_nn_forward.1} parent=1 // pred_check
      _
    $region35: #{dense_nn_forward.1} parent=1 // pred_check_branch
      %43 = sbr.rel (0) target = $region37
    $region36: #{dense_nn_forward.1} parent=1 // pred_region
      _
    $region37: #{dense_nn_forward.1} parent=1 // pred_fallthru
      _
    // Predicated region
    $region38: #{dense_nn_forward.1} parent=1 // pred_check
      _
    $region39: #{dense_nn_forward.1} parent=1 // pred_check_branch
      %45 = sbr.rel (0) target = $region41
    $region40: #{dense_nn_forward.1} parent=1 // pred_region
      %47 = dma.done [#allocation3], 256
    $region41: #{dense_nn_forward.1} parent=1 // pred_fallthru
      _
    %v49 = vld [vmem:[%s0] sm:$0xff]
    %v50 = vld [vmem:[%s1] sm:$0x3]
    %v51 = vld [vmem:[%s2] sm:$0x1]
    %v52 = vpack.c.bf16 %v49, %v49
    %v54 = vperm.slane %v51, 0
    %vm56 = vcmask 31744
    %v58 = vsel %vm56, %v52, 0
    %vm60 = vcmask 1041408
    %v62 = vsel %vm60, %v50, 0
    %64 = vmatpush.bf16.msra.mxu0 0
    %65 = vmatpush.bf16.msra.mxu0 0
    %66 = vmatpush.bf16.msra.mxu0 0
    %67 = vmatpush.bf16.msra.mxu0 0
    %68 = vmatpush.bf16.msra.mxu0 0
    %69 = vmatpush.bf16.msra.mxu0 0
    %70 = vmatpush.bf16.msra.mxu0 0
    %71 = vmatpush.bf16.msra.mxu0 %v62
    %72 = vmatmul.bf16.gmra.mxu0 %v58
    %v73 = vpop.f32.mrf.mxu0
    %v74 = vadd.f32 %v54, %v73
    %v75 = vpop.f32.mrf.mxu0
    %76 = vdwg.mxu0
    %v77 = vtanh.pop %v74
    %v78 = vld [vmem:[%s3] sm:$0xf]
    %v79 = vld [vmem:[%s3 + $0x4] sm:$0xf]
    %v80 = vld [vmem:[%s3 + $0x8] sm:$0xf]
    %v81 = vld [vmem:[%s3 + $0xc] sm:$0xf]
    %v82 = vld [vmem:[%s4] sm:$0x1]
    %v83 = vpack.c.bf16 %v77, %v77
    %v85 = vperm.slane %v82, 0
    %v91 = vunpack.c.l.b16 %v78
    %v92 = vunpack.c.l.b16 %v79
    %v93 = vunpack.c.l.b16 %v80
    %v94 = vunpack.c.l.b16 %v81
    %v95 = vpack.c.b16 %v92, %v91
    %v96 = vpack.c.b16 %v94, %v93
    %vm99 = vcmask 261120
    %v101 = vsel %vm99, %v83, 0
    %103 = vmatpush.bf16.msra.mxu0 0
    %104 = vmatpush.bf16.msra.mxu0 0
    %105 = vmatpush.bf16.msra.mxu0 0
    %106 = vmatpush.bf16.msra.mxu0 0
    %107 = vmatpush.bf16.msra.mxu0 0
    %108 = vmatpush.bf16.msra.mxu0 0
    %109 = vmatpush.bf16.msra.mxu0 %v96
    %110 = vmatpush.bf16.msra.mxu0 %v95
    %111 = vmatmul.bf16.gmra.mxu0 %v101
    %v112 = vpop.f32.mrf.mxu0
    %v113 = vadd.f32 %v85, %v112
    %v114 = vpop.f32.mrf.mxu0
    %115 = vdwg.mxu0
    %v116 = vtanh.pop %v113
    %v117 = vld [vmem:[#allocation2] sm:$0xf]
    %v118 = vld [vmem:[#allocation2 + $0x4] sm:$0xf]
    %v119 = vld [vmem:[#allocation2 + $0x8] sm:$0xf]
    %v120 = vld [vmem:[#allocation2 + $0xc] sm:$0xf]
    %v121 = vld [vmem:[%s6] sm:$0x1]
    %v122 = vpack.c.bf16 %v116, %v116
    %v124 = vperm.slane %v121, 0
    %v130 = vunpack.c.l.b16 %v117
    %v131 = vunpack.c.l.b16 %v118
    %v132 = vunpack.c.l.b16 %v119
    %v133 = vunpack.c.l.b16 %v120
    %v134 = vpack.c.b16 %v131, %v130
    %v135 = vpack.c.b16 %v133, %v132
    %v139 = vsel %vm99, %v122, 0
    %141 = vmatpush.bf16.msra.mxu0 0
    %142 = vmatpush.bf16.msra.mxu0 0
    %143 = vmatpush.bf16.msra.mxu0 0
    %144 = vmatpush.bf16.msra.mxu0 0
    %145 = vmatpush.bf16.msra.mxu0 0
    %146 = vmatpush.bf16.msra.mxu0 0
    %147 = vmatpush.bf16.msra.mxu0 %v135
    %148 = vmatpush.bf16.msra.mxu0 %v134
    %149 = vmatmul.bf16.gmra.mxu0 %v139
    %v150 = vpop.f32.mrf.mxu0
    %v151 = vadd.f32 %v124, %v150
    %v152 = vpop.f32.mrf.mxu0
    %153 = vdwg.mxu0
    %v154 = vtanh.pop %v151
    %v155 = vld [vmem:[%s7] sm:$0xf]
    %v156 = vld [vmem:[%s7 + $0x4] sm:$0xf]
    %v157 = vld [vmem:[%s7 + $0x8] sm:$0xf]
    %v158 = vld [vmem:[%s7 + $0xc] sm:$0xf]
    %v159 = vld [vmem:[%s8] sm:$0x1]
    %v160 = vpack.c.bf16 %v154, %v154
    %v162 = vperm.slane %v159, 0
    %v168 = vunpack.c.l.b16 %v155
    %v169 = vunpack.c.l.b16 %v156
    %v170 = vunpack.c.l.b16 %v157
    %v171 = vunpack.c.l.b16 %v158
    %v172 = vpack.c.b16 %v169, %v168
    %v173 = vpack.c.b16 %v171, %v170
    %v177 = vsel %vm99, %v160, 0
    %179 = vmatpush.bf16.msra.mxu0 0
    %180 = vmatpush.bf16.msra.mxu0 0
    %181 = vmatpush.bf16.msra.mxu0 0
    %182 = vmatpush.bf16.msra.mxu0 0
    %183 = vmatpush.bf16.msra.mxu0 0
    %184 = vmatpush.bf16.msra.mxu0 0
    %185 = vmatpush.bf16.msra.mxu0 %v173
    %186 = vmatpush.bf16.msra.mxu0 %v172
    %187 = vmatmul.bf16.gmra.mxu0 %v177
    %v188 = vpop.f32.mrf.mxu0
    %v189 = vadd.f32 %v162, %v188
    %v190 = vpop.f32.mrf.mxu0
    %191 = vdwg.mxu0
    %vm192 = vcmask 15360
    %193 = vst.msk [vmem:[%s9] sm:$0xff] %vm192, %v189
    // Predicated region
    $region42: #{dense_nn_forward.1} parent=1 // pred_check
      _
    $region43: #{dense_nn_forward.1} parent=1 // pred_check_branch
      %195 = sbr.rel (0) target = $region45
    $region44: #{dense_nn_forward.1} parent=1 // pred_region
      _
    $region45: #{dense_nn_forward.1} parent=1 // pred_fallthru
      _
    // Predicated region
    $region46: #{dense_nn_forward.1} parent=1 // pred_check
      _
    $region47: #{dense_nn_forward.1} parent=1 // pred_check_branch
      %197 = sbr.rel (0) target = $region49
    $region48: #{dense_nn_forward.1} parent=1 // pred_region
      _
    $region49: #{dense_nn_forward.1} parent=1 // pred_fallthru
      _
    %198 = vsyncpa [#allocation3], 1

</llo_original>
